<compile_context>
chip_gen: v7x
topology: tpu7x:2x2x1
jax: 0.10.0
libtpu: 0.0.40
codegen_flags: <defaults>
</compile_context>

<pallas_src>
import functools

import jax
import jax.numpy as jnp
from jax.experimental import pallas as pl
from jax.experimental.pallas import tpu as pltpu


def fcn_kernel(x_ref, w_in_ref, b_in_ref, w_h_ref, b_h_ref, w_out_ref,
               b_out_ref, o_ref, *, bf16_epilogue):
    # x_ref:     (N_INPUT, TILE_B)            bf16
    # w_in_ref:  (N_HIDDEN, N_INPUT)          bf16 ; b_in_ref:  (N_HIDDEN, 1) f32
    # w_h_ref:   (L-1, N_HIDDEN, N_HIDDEN)    bf16 ; b_h_ref:   (L-1, N_HIDDEN, 1) f32
    # w_out_ref: (N_OUTPUT, N_HIDDEN)         bf16 ; b_out_ref: (N_OUTPUT, 1) f32
    # o_ref:     (N_OUTPUT, TILE_B)           f32

    def layer(w, h, b):
        # MXU: bf16 x bf16 -> f32 accumulate; bias add on the f32 accumulator.
        acc = jnp.dot(w, h, preferred_element_type=jnp.float32) + b
        if bf16_epilogue:
            # v6e / v7x: bf16 EUP tanh (~2x element throughput); result is rounded
            # to bf16 before the next matmul anyway.
            return jnp.tanh(acc.astype(jnp.bfloat16))
        # v5e-safe default: f32 tanh, then store h in bf16 (halves live vregs).
        return jnp.tanh(acc).astype(jnp.bfloat16)

    # First layer: Linear(N_INPUT -> N_HIDDEN) + tanh.
    h = layer(w_in_ref[...], x_ref[...], b_in_ref[...])

    # Hidden layers: slice one (H, H) weight out of the stacked ref per layer.
    for l in range(w_h_ref.shape[0]):  # small static trip count -> unrolled
        h = layer(w_h_ref[l], h, b_h_ref[l])

    # Output layer: Linear(N_HIDDEN -> N_OUTPUT), no activation, f32 result.
    o_ref[...] = (
        jnp.dot(w_out_ref[...], h, preferred_element_type=jnp.float32)
        + b_out_ref[...])


@functools.partial(jax.jit, static_argnames=("tile_b", "bf16_epilogue"))
def fcn_forward(x, w_in, b_in, w_h, b_h, w_out, b_out, *, tile_b=None,
                bf16_epilogue=False):
    """x: (B, N_INPUT) f32.  Weights (out, in) (ideally pre-cast bf16), biases (out, 1) f32.

    Returns (B, N_OUTPUT) f32, matching FCN.forward semantics.
    """
    B, n_in = x.shape
    n_hid = w_in.shape[0]
    n_out = w_out.shape[0]
    n_hidden_layers = w_h.shape[0]
    assert n_hidden_layers >= 1, "N_LAYERS must be >= 2 (module has N_LAYERS-1 hidden blocks)"

    if tile_b is None:
        # Step-overhead bound at these widths: cover the whole padded batch in one
        # grid step when B is small; otherwise 1024-wide tiles (h is bf16, so this
        # stays well inside vreg budget).  Always a multiple of 128 (lane width).
        tile_b = min(1024, 128 * pl.cdiv(B, 128))
    num_tiles = pl.cdiv(B, tile_b)
    pB = num_tiles * tile_b

    # Lane-dense layout (batch on lanes); single fused transpose + pad + cast
    # inside the jit.  Padded columns compute tanh(bias) garbage, sliced off below.
    x_t = jnp.pad(jnp.transpose(x), ((0, 0), (0, pB - B))).astype(jnp.bfloat16)

    # No-ops if params were already cast at init (the recommended hot path).
    w_in_b = w_in.astype(jnp.bfloat16)
    w_h_b = w_h.astype(jnp.bfloat16)
    w_out_b = w_out.astype(jnp.bfloat16)

    const2 = lambda i: (0, 0)
    const3 = lambda i: (0, 0, 0)

    out_t = pl.pallas_call(
        functools.partial(fcn_kernel, bf16_epilogue=bf16_epilogue),
        out_shape=jax.ShapeDtypeStruct((n_out, pB), jnp.float32),
        grid=(num_tiles,),
        in_specs=[
            pl.BlockSpec((n_in, tile_b), lambda i: (0, i)),          # x tile (pipelined)
            pl.BlockSpec((n_hid, n_in), const2),                     # w_in  (VMEM-resident)
            pl.BlockSpec((n_hid, 1), const2),                        # b_in
            pl.BlockSpec((n_hidden_layers, n_hid, n_hid), const3),   # w_h stack
            pl.BlockSpec((n_hidden_layers, n_hid, 1), const3),       # b_h stack
            pl.BlockSpec((n_out, n_hid), const2),                    # w_out
            pl.BlockSpec((n_out, 1), const2),                        # b_out
        ],
        out_specs=pl.BlockSpec((n_out, tile_b), lambda i: (0, i)),
        compiler_params=pltpu.CompilerParams(
            dimension_semantics=("parallel",)),                      # megacore / 2 TCs
    )(x_t, w_in_b, b_in, w_h_b, b_h, w_out_b, b_out)

    # Slice padding off BEFORE transposing (output stays lane-dense in the kernel;
    # this 2-row transpose is trivial).
    return jnp.transpose(out_t[:, :B])


def fcn_reference(x, w_in, b_in, w_h, b_h, w_out, b_out, *, bf16_epilogue=False):
    # Pure-JAX reference emulating the kernel's bf16 MXU inputs + f32 accumulate
    # and the bf16 storage of h between layers.
    f32 = lambda a: a.astype(jnp.float32)
    rnd = lambda a: a.astype(jnp.bfloat16).astype(jnp.float32)

    def act(a):
        if bf16_epilogue:
            return jnp.tanh(a.astype(jnp.bfloat16)).astype(jnp.float32)
        return jnp.tanh(a).astype(jnp.bfloat16).astype(jnp.float32)

    h = act(rnd(x) @ f32(w_in).T + f32(b_in).T)
    for l in range(w_h.shape[0]):
        h = act(h @ f32(w_h[l]).T + f32(b_h[l]).T)
    return h @ f32(w_out).T + f32(b_out).T


def init_params(key, n_input, n_output, n_hidden, n_layers):
    # Deterministic synthetic parameters, stored transposed as (out_features, in_features).
    # Weights are cast to bf16 ONCE here (hoisted out of the per-call hot path);
    # biases stay f32 (added on the f32 accumulator inside the kernel).
    ks = jax.random.split(key, 6)
    scale = 0.1
    w_in = (scale * jax.random.normal(ks[0], (n_hidden, n_input), jnp.float32)
            ).astype(jnp.bfloat16)
    b_in = scale * jax.random.normal(ks[1], (n_hidden, 1), jnp.float32)
    w_h = (scale * jax.random.normal(
        ks[2], (n_layers - 1, n_hidden, n_hidden), jnp.float32)).astype(jnp.bfloat16)
    b_h = scale * jax.random.normal(
        ks[3], (n_layers - 1, n_hidden, 1), jnp.float32)
    w_out = (scale * jax.random.normal(ks[4], (n_output, n_hidden), jnp.float32)
             ).astype(jnp.bfloat16)
    b_out = scale * jax.random.normal(ks[5], (n_output, 1), jnp.float32)
    return w_in, b_in, w_h, b_h, w_out, b_out


if __name__ == "__main__":
    N_INPUT, N_OUTPUT, N_HIDDEN, N_LAYERS = 4, 2, 32, 3
    BATCH = 512   # small B -> adaptive tile covers the whole batch in ONE grid step

    key = jax.random.PRNGKey(0)
    kx, kp = jax.random.split(key)
    x = jax.random.normal(kx, (BATCH, N_INPUT), jnp.float32)
    params = init_params(kp, N_INPUT, N_OUTPUT, N_HIDDEN, N_LAYERS)

    # Default epilogue (f32 tanh, bf16 h storage) is correct & fast on v5e/v6e/v7x;
    # pass bf16_epilogue=True on v6e/v7x to also move tanh onto the bf16 EUP path.
    out = fcn_forward(x, *params)
    out = jax.block_until_ready(out)

    ref = fcn_reference(x, *params)
    assert out.shape == (BATCH, N_OUTPUT)
    assert jnp.allclose(out, ref, atol=5e-3, rtol=5e-3), "mismatch vs reference"

    print("KERNEL_OK")
</pallas_src>

<mosaic_0001>
module attributes {stable_mosaic.version = 11 : i64} {
  func.func @fcn_kernel(%arg0: i32, %arg1: memref<4x512xbf16, #tpu.memory_space<vmem>>, %arg2: memref<32x4xbf16, #tpu.memory_space<vmem>>, %arg3: memref<32x1xf32, #tpu.memory_space<vmem>>, %arg4: memref<2x32x32xbf16, #tpu.memory_space<vmem>>, %arg5: memref<2x32x1xf32, #tpu.memory_space<vmem>>, %arg6: memref<2x32xbf16, #tpu.memory_space<vmem>>, %arg7: memref<2x1xf32, #tpu.memory_space<vmem>>, %arg8: memref<2x512xf32, #tpu.memory_space<vmem>>) attributes {dimension_semantics = [#tpu.dimension_semantics<parallel>], iteration_bounds = array<i64: 1>, scalar_prefetch = 0 : i64, scratch_operands = 0 : i64, tpu.core_type = #tpu.core_type<tc>, window_params = [{transform_indices = @transform_0, window_bounds = array<i64: 4, 512>}, {pipeline_mode = #tpu.pipeline_mode<synchronous>, transform_indices = @transform_1, window_bounds = array<i64: 32, 4>}, {pipeline_mode = #tpu.pipeline_mode<synchronous>, transform_indices = @transform_2, window_bounds = array<i64: 32, 1>}, {pipeline_mode = #tpu.pipeline_mode<synchronous>, transform_indices = @transform_3, window_bounds = array<i64: 2, 32, 32>}, {pipeline_mode = #tpu.pipeline_mode<synchronous>, transform_indices = @transform_4, window_bounds = array<i64: 2, 32, 1>}, {pipeline_mode = #tpu.pipeline_mode<synchronous>, transform_indices = @transform_5, window_bounds = array<i64: 2, 32>}, {pipeline_mode = #tpu.pipeline_mode<synchronous>, transform_indices = @transform_6, window_bounds = array<i64: 2, 1>}, {transform_indices = @transform_7, window_bounds = array<i64: 2, 512>}]} {
    %c0 = arith.constant 0 : index
    %c0_0 = arith.constant 0 : index
    %0 = vector.load %arg2[%c0, %c0_0] : memref<32x4xbf16, #tpu.memory_space<vmem>>, vector<32x4xbf16>
    %c0_1 = arith.constant 0 : index
    %c0_2 = arith.constant 0 : index
    %1 = vector.load %arg1[%c0_1, %c0_2] : memref<4x512xbf16, #tpu.memory_space<vmem>>, vector<4x512xbf16>
    %c0_3 = arith.constant 0 : index
    %c0_4 = arith.constant 0 : index
    %2 = vector.load %arg3[%c0_3, %c0_4] : memref<32x1xf32, #tpu.memory_space<vmem>>, vector<32x1xf32>
    %cst = arith.constant dense<0.000000e+00> : vector<32x512xf32>
    %3 = tpu.matmul %0, %1, %cst {dimension_numbers = #tpu.dot_dimension_numbers<[1], [0], [0], [1], [0, 0, 1, 1], [], []>} : vector<32x4xbf16>, vector<4x512xbf16>, vector<32x512xf32> -> vector<32x512xf32>
    %4 = vector.broadcast %2 : vector<32x1xf32> to vector<32x512xf32>
    %5 = arith.addf %3, %4 : vector<32x512xf32>
    %6 = math.tanh %5 : vector<32x512xf32>
    %7 = arith.truncf %6 : vector<32x512xf32> to vector<32x512xbf16>
    %c0_5 = arith.constant 0 : index
    %c0_6 = arith.constant 0 : index
    %c0_7 = arith.constant 0 : index
    %8 = vector.load %arg4[%c0_5, %c0_6, %c0_7] : memref<2x32x32xbf16, #tpu.memory_space<vmem>>, vector<1x32x32xbf16>
    %9 = vector.shape_cast %8 : vector<1x32x32xbf16> to vector<32x32xbf16>
    %c0_8 = arith.constant 0 : index
    %c0_9 = arith.constant 0 : index
    %c0_10 = arith.constant 0 : index
    %10 = vector.load %arg5[%c0_8, %c0_9, %c0_10] : memref<2x32x1xf32, #tpu.memory_space<vmem>>, vector<1x32x1xf32>
    %11 = vector.shape_cast %10 : vector<1x32x1xf32> to vector<32x1xf32>
    %cst_11 = arith.constant dense<0.000000e+00> : vector<32x512xf32>
    %12 = tpu.matmul %9, %7, %cst_11 {dimension_numbers = #tpu.dot_dimension_numbers<[1], [0], [0], [1], [0, 0, 1, 1], [], []>} : vector<32x32xbf16>, vector<32x512xbf16>, vector<32x512xf32> -> vector<32x512xf32>
    %13 = vector.broadcast %11 : vector<32x1xf32> to vector<32x512xf32>
    %14 = arith.addf %12, %13 : vector<32x512xf32>
    %15 = math.tanh %14 : vector<32x512xf32>
    %16 = arith.truncf %15 : vector<32x512xf32> to vector<32x512xbf16>
    %c1 = arith.constant 1 : index
    %c0_12 = arith.constant 0 : index
    %c0_13 = arith.constant 0 : index
    %17 = vector.load %arg4[%c1, %c0_12, %c0_13] : memref<2x32x32xbf16, #tpu.memory_space<vmem>>, vector<1x32x32xbf16>
    %18 = vector.shape_cast %17 : vector<1x32x32xbf16> to vector<32x32xbf16>
    %c1_14 = arith.constant 1 : index
    %c0_15 = arith.constant 0 : index
    %c0_16 = arith.constant 0 : index
    %19 = vector.load %arg5[%c1_14, %c0_15, %c0_16] : memref<2x32x1xf32, #tpu.memory_space<vmem>>, vector<1x32x1xf32>
    %20 = vector.shape_cast %19 : vector<1x32x1xf32> to vector<32x1xf32>
    %cst_17 = arith.constant dense<0.000000e+00> : vector<32x512xf32>
    %21 = tpu.matmul %18, %16, %cst_17 {dimension_numbers = #tpu.dot_dimension_numbers<[1], [0], [0], [1], [0, 0, 1, 1], [], []>} : vector<32x32xbf16>, vector<32x512xbf16>, vector<32x512xf32> -> vector<32x512xf32>
    %22 = vector.broadcast %20 : vector<32x1xf32> to vector<32x512xf32>
    %23 = arith.addf %21, %22 : vector<32x512xf32>
    %24 = math.tanh %23 : vector<32x512xf32>
    %25 = arith.truncf %24 : vector<32x512xf32> to vector<32x512xbf16>
    %c0_18 = arith.constant 0 : index
    %c0_19 = arith.constant 0 : index
    %26 = vector.load %arg6[%c0_18, %c0_19] : memref<2x32xbf16, #tpu.memory_space<vmem>>, vector<2x32xbf16>
    %cst_20 = arith.constant dense<0.000000e+00> : vector<2x512xf32>
    %27 = tpu.matmul %26, %25, %cst_20 {dimension_numbers = #tpu.dot_dimension_numbers<[1], [0], [0], [1], [0, 0, 1, 1], [], []>} : vector<2x32xbf16>, vector<32x512xbf16>, vector<2x512xf32> -> vector<2x512xf32>
    %c0_21 = arith.constant 0 : index
    %c0_22 = arith.constant 0 : index
    %28 = vector.load %arg7[%c0_21, %c0_22] : memref<2x1xf32, #tpu.memory_space<vmem>>, vector<2x1xf32>
    %29 = vector.broadcast %28 : vector<2x1xf32> to vector<2x512xf32>
    %30 = arith.addf %27, %29 : vector<2x512xf32>
    %c0_23 = arith.constant 0 : index
    %c0_24 = arith.constant 0 : index
    %31 = vector.load %arg8[%c0_23, %c0_24] : memref<2x512xf32, #tpu.memory_space<vmem>>, vector<2x512xf32>
    tpu.vector_store %arg8[%c0_23, %c0_24], %30 {strides = array<i32>} : memref<2x512xf32, #tpu.memory_space<vmem>>, vector<2x512xf32>,
    return
  }
  func.func @transform_0(%arg0: i32) -> (i32, i32) {
    %c0_i32 = arith.constant 0 : i32
    %c0_i32_0 = arith.constant 0 : i32
    return %c0_i32, %arg0 : i32, i32
  }
  func.func @transform_1(%arg0: i32) -> (i32, i32) {
    %c0_i32 = arith.constant 0 : i32
    %c0_i32_0 = arith.constant 0 : i32
    %c0_i32_1 = arith.constant 0 : i32
    return %c0_i32, %c0_i32_0 : i32, i32
  }
  func.func @transform_2(%arg0: i32) -> (i32, i32) {
    %c0_i32 = arith.constant 0 : i32
    %c0_i32_0 = arith.constant 0 : i32
    %c0_i32_1 = arith.constant 0 : i32
    return %c0_i32, %c0_i32_0 : i32, i32
  }
  func.func @transform_3(%arg0: i32) -> (i32, i32, i32) {
    %c0_i32 = arith.constant 0 : i32
    %c0_i32_0 = arith.constant 0 : i32
    %c0_i32_1 = arith.constant 0 : i32
    %c0_i32_2 = arith.constant 0 : i32
    return %c0_i32, %c0_i32_0, %c0_i32_1 : i32, i32, i32
  }
  func.func @transform_4(%arg0: i32) -> (i32, i32, i32) {
    %c0_i32 = arith.constant 0 : i32
    %c0_i32_0 = arith.constant 0 : i32
    %c0_i32_1 = arith.constant 0 : i32
    %c0_i32_2 = arith.constant 0 : i32
    return %c0_i32, %c0_i32_0, %c0_i32_1 : i32, i32, i32
  }
  func.func @transform_5(%arg0: i32) -> (i32, i32) {
    %c0_i32 = arith.constant 0 : i32
    %c0_i32_0 = arith.constant 0 : i32
    %c0_i32_1 = arith.constant 0 : i32
    return %c0_i32, %c0_i32_0 : i32, i32
  }
  func.func @transform_6(%arg0: i32) -> (i32, i32) {
    %c0_i32 = arith.constant 0 : i32
    %c0_i32_0 = arith.constant 0 : i32
    %c0_i32_1 = arith.constant 0 : i32
    return %c0_i32, %c0_i32_0 : i32, i32
  }
  func.func @transform_7(%arg0: i32) -> (i32, i32) {
    %c0_i32 = arith.constant 0 : i32
    %c0_i32_0 = arith.constant 0 : i32
    return %c0_i32, %arg0 : i32, i32
  }
}

</mosaic_0001>

<llo_original>
// kernel: fcn_forward.1
$region0: #{fcn_forward.1}
  #allocation0 [shape = 'u32[]', space=smem, size = 0x4, offset = 0x4, fixed_abs, tag = 'smem constant byte address 0x4 - core index']
  #allocation1 [shape = 'u32[144,128]{1,0:T(1,128)}', space=vmem, size = 0x12000, scoped, tag = 'internal scratch']
  %s0 = inlined_call_operand.vmem [shape: bf16[4,512], index: 0, kind: input, shape index: {}]
  %s1 = inlined_call_operand.vmem [shape: bf16[32,4], index: 1, kind: input, shape index: {}]
  %s2 = inlined_call_operand.vmem [shape: f32[32,1], index: 2, kind: input, shape index: {}]
  %s3 = inlined_call_operand.vmem [shape: bf16[2,32,32], index: 3, kind: input, shape index: {}]
  %s4 = inlined_call_operand.vmem [shape: f32[2,32,1], index: 4, kind: input, shape index: {}]
  %s5 = inlined_call_operand.vmem [shape: bf16[2,32], index: 5, kind: input, shape index: {}]
  %s6 = inlined_call_operand.vmem [shape: f32[2,1], index: 6, kind: input, shape index: {}]
  %s7 = inlined_call_operand.hbm [shape: f32[2,512], index: 7, kind: output, shape index: {}]
  %s8 = sld [smem:[#allocation0]]
  $region38: #{fcn_forward.1} parent=0
    _
  %s10 = ssub.s32 1, %s8
  %s11 = scalar_select 0, %s10, %s8
  $region1: #{fcn_forward.1} parent=0
    #allocation2 [shape = 'u8[4096]{0}', space=vmem, size = 0x1000, scoped, tag = 'output window, operand 0, single buffered']
    #allocation3 [shape = 's32[1]{0}', space=sflag, size = 0x4, scoped, tag = 'scoped memory for fcn_forward.1']
    %12 = vsyncpa [#allocation3], 0
    // Predicated region
    $region2: #{fcn_forward.1} parent=1 // pred_check
      _
    $region3: #{fcn_forward.1} parent=1 // pred_check_branch
      %14 = sbr.rel (0) target = $region5
    $region4: #{fcn_forward.1} parent=1 // pred_region
      _
    $region5: #{fcn_forward.1} parent=1 // pred_fallthru
      _
    // Predicated region
    $region6: #{fcn_forward.1} parent=1 // pred_check
      _
    $region7: #{fcn_forward.1} parent=1 // pred_check_branch
      %16 = sbr.rel (0) target = $region9
    $region8: #{fcn_forward.1} parent=1 // pred_region
      _
    $region9: #{fcn_forward.1} parent=1 // pred_fallthru
      _
    // Predicated region
    $region10: #{fcn_forward.1} parent=1 // pred_check
      _
    $region11: #{fcn_forward.1} parent=1 // pred_check_branch
      %18 = sbr.rel (0) target = $region13
    $region12: #{fcn_forward.1} parent=1 // pred_region
      _
    $region13: #{fcn_forward.1} parent=1 // pred_fallthru
      _
    // Predicated region
    $region14: #{fcn_forward.1} parent=1 // pred_check
      _
    $region15: #{fcn_forward.1} parent=1 // pred_check_branch
      %20 = sbr.rel (0) target = $region17
    $region16: #{fcn_forward.1} parent=1 // pred_region
      _
    $region17: #{fcn_forward.1} parent=1 // pred_fallthru
      _
    // Predicated region
    $region18: #{fcn_forward.1} parent=1 // pred_check
      _
    $region19: #{fcn_forward.1} parent=1 // pred_check_branch
      %22 = sbr.rel (0) target = $region21
    $region20: #{fcn_forward.1} parent=1 // pred_region
      _
    $region21: #{fcn_forward.1} parent=1 // pred_fallthru
      _
    // Predicated region
    $region22: #{fcn_forward.1} parent=1 // pred_check
      _
    $region23: #{fcn_forward.1} parent=1 // pred_check_branch
      %24 = sbr.rel (0) target = $region25
    $region24: #{fcn_forward.1} parent=1 // pred_region
      _
    $region25: #{fcn_forward.1} parent=1 // pred_fallthru
      _
    // Predicated region
    $region26: #{fcn_forward.1} parent=1 // pred_check
      _
    $region27: #{fcn_forward.1} parent=1 // pred_check_branch
      %26 = sbr.rel (0) target = $region29
    $region28: #{fcn_forward.1} parent=1 // pred_region
      _
    $region29: #{fcn_forward.1} parent=1 // pred_fallthru
      _
    %v28 = vld [vmem:[%s1] sm:$0xf]
    %v29 = vld [vmem:[%s1 + $0x4] sm:$0xf]
    %v30 = vld [vmem:[%s1 + $0x8] sm:$0xf]
    %v31 = vld [vmem:[%s1 + $0xc] sm:$0xf]
    %v32 = vld [vmem:[%s0] sm:$0xff]
    %v33 = vld [vmem:[%s2] sm:$0xff]
    %v34 = vld [vmem:[%s2 + $0x8] sm:$0xff]
    %v35 = vld [vmem:[%s2 + $0x10] sm:$0xff]
    %v36 = vld [vmem:[%s2 + $0x18] sm:$0xff]
    %38 = vset.pattern.permute.xlu0 0
    %39 = vperm.xlu0 %38, %v33
    %v40 = vpop.permute.xlu0 %39
    %43 = vset.pattern.permute.xlu0 0
    %44 = vperm.xlu0 %43, %v34
    %v45 = vpop.permute.xlu0 %44
    %48 = vset.pattern.permute.xlu0 0
    %49 = vperm.xlu0 %48, %v35
    %v50 = vpop.permute.xlu0 %49
    %53 = vset.pattern.permute.xlu0 0
    %54 = vperm.xlu0 %53, %v36
    %v55 = vpop.permute.xlu0 %54
    %v61 = vunpack.c.l.b16 %v28
    %v62 = vunpack.c.l.b16 %v29
    %v63 = vunpack.c.l.b16 %v30
    %v64 = vunpack.c.l.b16 %v31
    %v65 = vpack.c.b16 %v62, %v61
    %v66 = vpack.c.b16 %v64, %v63
    %v68 = vcombine.high %v32, %v32
    %v70 = vunpack.c.l.s4 1983009808
    %v71 = vunpack.c.0.s8 %v70
    %v72 = vlaneseq
    %v73 = vshrl.u32 %v72, 7
    %v74 = vsub.s32 %v71, %v73
    %v75 = vrot.slane %v32, %v74
    %v77 = vunpack.c.l.s4 1983009808
    %v78 = vunpack.c.0.s8 %v77
    %v79 = vlaneseq
    %v80 = vshrl.u32 %v79, 7
    %v81 = vsub.s32 %v78, %v80
    %v82 = vrot.slane %v68, %v81
    %v83 = vcombine.high %v75, %v75
    %v84 = vcombine.high %v82, %v82
    %vm85 = vcmask 31744
    %v87 = vsel %vm85, %v65, 0
    %v90 = vsel %vm85, %v66, 0
    %vm92 = vcmask 1041408
    %v94 = vsel %vm92, %v75, 0
    %v97 = vsel %vm92, %v83, 0
    %v100 = vsel %vm92, %v82, 0
    %v103 = vsel %vm92, %v84, 0
    %105 = vmatprep.subr.bf16.mxu0 %v97
    %106 = vmatpush1.bf16.msra.mxu0 %v94
    %107 = vmatprep.subr.bf16.mxu0 0
    %108 = vmatpush1.bf16.msra.mxu0 0
    %109 = vmatprep.subr.bf16.mxu0 0
    %110 = vmatpush1.bf16.msra.mxu0 0
    %111 = vmatprep.subr.bf16.mxu0 0
    %112 = vmatpush1.bf16.msra.mxu0 0
    %113 = vmatprep.subr.bf16.mxu0 0
    %114 = vmatpush1.bf16.msra.mxu0 0
    %115 = vmatprep.subr.bf16.mxu0 0
    %116 = vmatpush1.bf16.msra.mxu0 0
    %117 = vmatprep.subr.bf16.mxu0 0
    %118 = vmatpush1.bf16.msra.mxu0 0
    %119 = vmatprep.subr.bf16.mxu0 0
    %120 = vmatpush1.bf16.msra.mxu0 0
    %121 = vmatprep.subr.bf16.mxu0 0
    %122 = vmatpush1.bf16.msra.mxu0 0
    %123 = vmatprep.subr.bf16.mxu0 0
    %124 = vmatpush1.bf16.msra.mxu0 0
    %125 = vmatprep.subr.bf16.mxu0 0
    %126 = vmatpush1.bf16.msra.mxu0 0
    %127 = vmatprep.subr.bf16.mxu0 0
    %128 = vmatpush1.bf16.msra.mxu0 0
    %129 = vmatprep.subr.bf16.mxu0 0
    %130 = vmatpush1.bf16.msra.mxu0 0
    %131 = vmatprep.subr.bf16.mxu0 0
    %132 = vmatpush1.bf16.msra.mxu0 0
    %133 = vmatprep.subr.bf16.mxu0 0
    %134 = vmatpush1.bf16.msra.mxu0 0
    %135 = vmatprep.subr.bf16.mxu0 0
    %136 = vmatpush1.bf16.msra.mxu0 0
    %137 = vmatprep.mubr.bf16.mxu0 0
    %138 = vmatmul.mubr.bf16.gmra.mrb[0].mxu0 %v87
    %v139 = vpop.f32.mrb[0].mxu0
    %v140 = vadd.f32 %v40, %v139
    %v141 = vpop.f32.mrb[0].mxu0
    %v142 = vadd.f32 %v40, %v141
    %v143 = vpop.f32.mrb[0].mxu0
    %v144 = vadd.f32 %v45, %v143
    %v145 = vpop.f32.mrb[0].mxu0
    %v146 = vadd.f32 %v45, %v145
    %147 = vmatprep.mubr.bf16.mxu0 0
    %148 = vmatmul.mubr.bf16.gmra.mrb[0].mxu0 %v90
    %v149 = vpop.f32.mrb[0].mxu0
    %v150 = vadd.f32 %v50, %v149
    %v151 = vpop.f32.mrb[0].mxu0
    %v152 = vadd.f32 %v50, %v151
    %v153 = vpop.f32.mrb[0].mxu0
    %v154 = vadd.f32 %v55, %v153
    %v155 = vpop.f32.mrb[0].mxu0
    %v156 = vadd.f32 %v55, %v155
    %157 = vdwg.mxu0
    %158 = vmatprep.subr.bf16.mxu0 %v103
    %159 = vmatpush1.bf16.msra.mxu0 %v100
    %160 = vmatprep.subr.bf16.mxu0 0
    %161 = vmatpush1.bf16.msra.mxu0 0
    %162 = vmatprep.subr.bf16.mxu0 0
    %163 = vmatpush1.bf16.msra.mxu0 0
    %164 = vmatprep.subr.bf16.mxu0 0
    %165 = vmatpush1.bf16.msra.mxu0 0
    %166 = vmatprep.subr.bf16.mxu0 0
    %167 = vmatpush1.bf16.msra.mxu0 0
    %168 = vmatprep.subr.bf16.mxu0 0
    %169 = vmatpush1.bf16.msra.mxu0 0
    %170 = vmatprep.subr.bf16.mxu0 0
    %171 = vmatpush1.bf16.msra.mxu0 0
    %172 = vmatprep.subr.bf16.mxu0 0
    %173 = vmatpush1.bf16.msra.mxu0 0
    %174 = vmatprep.subr.bf16.mxu0 0
    %175 = vmatpush1.bf16.msra.mxu0 0
    %176 = vmatprep.subr.bf16.mxu0 0
    %177 = vmatpush1.bf16.msra.mxu0 0
    %178 = vmatprep.subr.bf16.mxu0 0
    %179 = vmatpush1.bf16.msra.mxu0 0
    %180 = vmatprep.subr.bf16.mxu0 0
    %181 = vmatpush1.bf16.msra.mxu0 0
    %182 = vmatprep.subr.bf16.mxu0 0
    %183 = vmatpush1.bf16.msra.mxu0 0
    %184 = vmatprep.subr.bf16.mxu0 0
    %185 = vmatpush1.bf16.msra.mxu0 0
    %186 = vmatprep.subr.bf16.mxu0 0
    %187 = vmatpush1.bf16.msra.mxu0 0
    %188 = vmatprep.subr.bf16.mxu0 0
    %189 = vmatpush1.bf16.msra.mxu0 0
    %190 = vmatprep.mubr.bf16.mxu0 0
    %191 = vmatmul.mubr.bf16.gmra.mrb[0].mxu0 %v87
    %v192 = vpop.f32.mrb[0].mxu0
    %v193 = vadd.f32 %v40, %v192
    %v194 = vpop.f32.mrb[0].mxu0
    %v195 = vadd.f32 %v40, %v194
    %v196 = vpop.f32.mrb[0].mxu0
    %v197 = vadd.f32 %v45, %v196
    %v198 = vpop.f32.mrb[0].mxu0
    %v199 = vadd.f32 %v45, %v198
    %200 = vmatprep.mubr.bf16.mxu0 0
    %201 = vmatmul.mubr.bf16.gmra.mrb[0].mxu0 %v90
    %v202 = vpop.f32.mrb[0].mxu0
    %v203 = vadd.f32 %v50, %v202
    %v204 = vpop.f32.mrb[0].mxu0
    %v205 = vadd.f32 %v50, %v204
    %v206 = vpop.f32.mrb[0].mxu0
    %v207 = vadd.f32 %v55, %v206
    %v208 = vpop.f32.mrb[0].mxu0
    %v209 = vadd.f32 %v55, %v208
    %210 = vdwg.mxu0
    %v211 = vtanh.pop %v140
    %v212 = vtanh.pop %v142
    %v213 = vtanh.pop %v193
    %v214 = vtanh.pop %v195
    %v215 = vtanh.pop %v144
    %v216 = vtanh.pop %v146
    %v217 = vtanh.pop %v197
    %v218 = vtanh.pop %v199
    %v219 = vtanh.pop %v150
    %v220 = vtanh.pop %v152
    %v221 = vtanh.pop %v203
    %v222 = vtanh.pop %v205
    %v223 = vtanh.pop %v154
    %v224 = vtanh.pop %v156
    %v225 = vtanh.pop %v207
    %v226 = vtanh.pop %v209
    %v227 = vpack.c.bf16 %v215, %v211
    %v228 = vpack.c.bf16 %v216, %v212
    %v229 = vpack.c.bf16 %v217, %v213
    %v230 = vpack.c.bf16 %v218, %v214
    %v231 = vpack.c.bf16 %v223, %v219
    %v232 = vpack.c.bf16 %v224, %v220
    %v233 = vpack.c.bf16 %v225, %v221
    %v234 = vpack.c.bf16 %v226, %v222
    %v235 = vld [vmem:[%s3] sm:$0xf]
    %v236 = vld [vmem:[%s3 + $0x4] sm:$0xf]
    %v237 = vld [vmem:[%s3 + $0x8] sm:$0xf]
    %v238 = vld [vmem:[%s3 + $0xc] sm:$0xf]
    %v239 = vld [vmem:[%s4] sm:$0xff]
    %v240 = vld [vmem:[%s4 + $0x8] sm:$0xff]
    %v241 = vld [vmem:[%s4 + $0x10] sm:$0xff]
    %v242 = vld [vmem:[%s4 + $0x18] sm:$0xff]
    %244 = vset.pattern.permute.xlu0 0
    %245 = vperm.xlu0 %244, %v239
    %v246 = vpop.permute.xlu0 %245
    %249 = vset.pattern.permute.xlu0 0
    %250 = vperm.xlu0 %249, %v240
    %v251 = vpop.permute.xlu0 %250
    %254 = vset.pattern.permute.xlu0 0
    %255 = vperm.xlu0 %254, %v241
    %v256 = vpop.permute.xlu0 %255
    %259 = vset.pattern.permute.xlu0 0
    %260 = vperm.xlu0 %259, %v242
    %v261 = vpop.permute.xlu0 %260
    %v267 = vunpack.c.l.b16 %v235
    %v268 = vunpack.c.l.b16 %v236
    %v269 = vunpack.c.l.b16 %v237
    %v270 = vunpack.c.l.b16 %v238
    %v271 = vpack.c.b16 %v268, %v267
    %v272 = vpack.c.b16 %v270, %v269
    %vm273 = vcmask 261120
    %v275 = vsel %vm273, %v271, 0
    %v278 = vsel %vm273, %v272, 0
    %280 = vmatprep.subr.bf16.mxu0 %v228
    %281 = vmatpush1.bf16.msra.mxu0 %v227
    %282 = vmatprep.subr.bf16.mxu0 %v232
    %283 = vmatpush1.bf16.msra.mxu0 %v231
    %284 = vmatprep.subr.bf16.mxu0 0
    %285 = vmatpush1.bf16.msra.mxu0 0
    %286 = vmatprep.subr.bf16.mxu0 0
    %287 = vmatpush1.bf16.msra.mxu0 0
    %288 = vmatprep.subr.bf16.mxu0 0
    %289 = vmatpush1.bf16.msra.mxu0 0
    %290 = vmatprep.subr.bf16.mxu0 0
    %291 = vmatpush1.bf16.msra.mxu0 0
    %292 = vmatprep.subr.bf16.mxu0 0
    %293 = vmatpush1.bf16.msra.mxu0 0
    %294 = vmatprep.subr.bf16.mxu0 0
    %295 = vmatpush1.bf16.msra.mxu0 0
    %296 = vmatprep.subr.bf16.mxu0 0
    %297 = vmatpush1.bf16.msra.mxu0 0
    %298 = vmatprep.subr.bf16.mxu0 0
    %299 = vmatpush1.bf16.msra.mxu0 0
    %300 = vmatprep.subr.bf16.mxu0 0
    %301 = vmatpush1.bf16.msra.mxu0 0
    %302 = vmatprep.subr.bf16.mxu0 0
    %303 = vmatpush1.bf16.msra.mxu0 0
    %304 = vmatprep.subr.bf16.mxu0 0
    %305 = vmatpush1.bf16.msra.mxu0 0
    %306 = vmatprep.subr.bf16.mxu0 0
    %307 = vmatpush1.bf16.msra.mxu0 0
    %308 = vmatprep.subr.bf16.mxu0 0
    %309 = vmatpush1.bf16.msra.mxu0 0
    %310 = vmatprep.subr.bf16.mxu0 0
    %311 = vmatpush1.bf16.msra.mxu0 0
    %312 = vmatprep.mubr.bf16.mxu0 0
    %313 = vmatmul.mubr.bf16.gmra.mrb[0].mxu0 %v275
    %v314 = vpop.f32.mrb[0].mxu0
    %v315 = vadd.f32 %v246, %v314
    %v316 = vpop.f32.mrb[0].mxu0
    %v317 = vadd.f32 %v246, %v316
    %v318 = vpop.f32.mrb[0].mxu0
    %v319 = vadd.f32 %v251, %v318
    %v320 = vpop.f32.mrb[0].mxu0
    %v321 = vadd.f32 %v251, %v320
    %322 = vmatprep.mubr.bf16.mxu0 0
    %323 = vmatmul.mubr.bf16.gmra.mrb[0].mxu0 %v278
    %v324 = vpop.f32.mrb[0].mxu0
    %v325 = vadd.f32 %v256, %v324
    %v326 = vpop.f32.mrb[0].mxu0
    %v327 = vadd.f32 %v256, %v326
    %v328 = vpop.f32.mrb[0].mxu0
    %v329 = vadd.f32 %v261, %v328
    %v330 = vpop.f32.mrb[0].mxu0
    %v331 = vadd.f32 %v261, %v330
    %332 = vdwg.mxu0
    %333 = vmatprep.subr.bf16.mxu0 %v230
    %334 = vmatpush1.bf16.msra.mxu0 %v229
    %335 = vmatprep.subr.bf16.mxu0 %v234
    %336 = vmatpush1.bf16.msra.mxu0 %v233
    %337 = vmatprep.subr.bf16.mxu0 0
    %338 = vmatpush1.bf16.msra.mxu0 0
    %339 = vmatprep.subr.bf16.mxu0 0
    %340 = vmatpush1.bf16.msra.mxu0 0
    %341 = vmatprep.subr.bf16.mxu0 0
    %342 = vmatpush1.bf16.msra.mxu0 0
    %343 = vmatprep.subr.bf16.mxu0 0
    %344 = vmatpush1.bf16.msra.mxu0 0
    %345 = vmatprep.subr.bf16.mxu0 0
    %346 = vmatpush1.bf16.msra.mxu0 0
    %347 = vmatprep.subr.bf16.mxu0 0
    %348 = vmatpush1.bf16.msra.mxu0 0
    %349 = vmatprep.subr.bf16.mxu0 0
    %350 = vmatpush1.bf16.msra.mxu0 0
    %351 = vmatprep.subr.bf16.mxu0 0
    %352 = vmatpush1.bf16.msra.mxu0 0
    %353 = vmatprep.subr.bf16.mxu0 0
    %354 = vmatpush1.bf16.msra.mxu0 0
    %355 = vmatprep.subr.bf16.mxu0 0
    %356 = vmatpush1.bf16.msra.mxu0 0
    %357 = vmatprep.subr.bf16.mxu0 0
    %358 = vmatpush1.bf16.msra.mxu0 0
    %359 = vmatprep.subr.bf16.mxu0 0
    %360 = vmatpush1.bf16.msra.mxu0 0
    %361 = vmatprep.subr.bf16.mxu0 0
    %362 = vmatpush1.bf16.msra.mxu0 0
    %363 = vmatprep.subr.bf16.mxu0 0
    %364 = vmatpush1.bf16.msra.mxu0 0
    %365 = vmatprep.mubr.bf16.mxu0 0
    %366 = vmatmul.mubr.bf16.gmra.mrb[0].mxu0 %v275
    %v367 = vpop.f32.mrb[0].mxu0
    %v368 = vadd.f32 %v246, %v367
    %v369 = vpop.f32.mrb[0].mxu0
    %v370 = vadd.f32 %v246, %v369
    %v371 = vpop.f32.mrb[0].mxu0
    %v372 = vadd.f32 %v251, %v371
    %v373 = vpop.f32.mrb[0].mxu0
    %v374 = vadd.f32 %v251, %v373
    %375 = vmatprep.mubr.bf16.mxu0 0
    %376 = vmatmul.mubr.bf16.gmra.mrb[0].mxu0 %v278
    %v377 = vpop.f32.mrb[0].mxu0
    %v378 = vadd.f32 %v256, %v377
    %v379 = vpop.f32.mrb[0].mxu0
    %v380 = vadd.f32 %v256, %v379
    %v381 = vpop.f32.mrb[0].mxu0
    %v382 = vadd.f32 %v261, %v381
    %v383 = vpop.f32.mrb[0].mxu0
    %v384 = vadd.f32 %v261, %v383
    %385 = vdwg.mxu0
    %v386 = vtanh.pop %v315
    %v387 = vtanh.pop %v317
    %v388 = vtanh.pop %v368
    %v389 = vtanh.pop %v370
    %v390 = vtanh.pop %v319
    %v391 = vtanh.pop %v321
    %v392 = vtanh.pop %v372
    %v393 = vtanh.pop %v374
    %v394 = vtanh.pop %v325
    %v395 = vtanh.pop %v327
    %v396 = vtanh.pop %v378
    %v397 = vtanh.pop %v380
    %v398 = vtanh.pop %v329
    %v399 = vtanh.pop %v331
    %v400 = vtanh.pop %v382
    %v401 = vtanh.pop %v384
    %v402 = vpack.c.bf16 %v390, %v386
    %v403 = vpack.c.bf16 %v391, %v387
    %v404 = vpack.c.bf16 %v392, %v388
    %v405 = vpack.c.bf16 %v393, %v389
    %v406 = vpack.c.bf16 %v398, %v394
    %v407 = vpack.c.bf16 %v399, %v395
    %v408 = vpack.c.bf16 %v400, %v396
    %v409 = vpack.c.bf16 %v401, %v397
    %s410 = scalar_lea.vmem %s3, 16
    %v411 = vld [vmem:[%s410] sm:$0xf]
    %v412 = vld [vmem:[%s410 + $0x4] sm:$0xf]
    %v413 = vld [vmem:[%s410 + $0x8] sm:$0xf]
    %v414 = vld [vmem:[%s410 + $0xc] sm:$0xf]
    %s415 = scalar_lea.vmem %s4, 32
    %v416 = vld [vmem:[%s415] sm:$0xff]
    %v417 = vld [vmem:[%s415 + $0x8] sm:$0xff]
    %v418 = vld [vmem:[%s415 + $0x10] sm:$0xff]
    %v419 = vld [vmem:[%s415 + $0x18] sm:$0xff]
    %421 = vset.pattern.permute.xlu0 0
    %422 = vperm.xlu0 %421, %v416
    %v423 = vpop.permute.xlu0 %422
    %426 = vset.pattern.permute.xlu0 0
    %427 = vperm.xlu0 %426, %v417
    %v428 = vpop.permute.xlu0 %427
    %431 = vset.pattern.permute.xlu0 0
    %432 = vperm.xlu0 %431, %v418
    %v433 = vpop.permute.xlu0 %432
    %436 = vset.pattern.permute.xlu0 0
    %437 = vperm.xlu0 %436, %v419
    %v438 = vpop.permute.xlu0 %437
    %v444 = vunpack.c.l.b16 %v411
    %v445 = vunpack.c.l.b16 %v412
    %v446 = vunpack.c.l.b16 %v413
    %v447 = vunpack.c.l.b16 %v414
    %v448 = vpack.c.b16 %v445, %v444
    %v449 = vpack.c.b16 %v447, %v446
    %v451 = vsel %vm273, %v448, 0
    %v454 = vsel %vm273, %v449, 0
    %456 = vmatprep.subr.bf16.mxu0 %v403
    %457 = vmatpush1.bf16.msra.mxu0 %v402
    %458 = vmatprep.subr.bf16.mxu0 %v407
    %459 = vmatpush1.bf16.msra.mxu0 %v406
    %460 = vmatprep.subr.bf16.mxu0 0
    %461 = vmatpush1.bf16.msra.mxu0 0
    %462 = vmatprep.subr.bf16.mxu0 0
    %463 = vmatpush1.bf16.msra.mxu0 0
    %464 = vmatprep.subr.bf16.mxu0 0
    %465 = vmatpush1.bf16.msra.mxu0 0
    %466 = vmatprep.subr.bf16.mxu0 0
    %467 = vmatpush1.bf16.msra.mxu0 0
    %468 = vmatprep.subr.bf16.mxu0 0
    %469 = vmatpush1.bf16.msra.mxu0 0
    %470 = vmatprep.subr.bf16.mxu0 0
    %471 = vmatpush1.bf16.msra.mxu0 0
    %472 = vmatprep.subr.bf16.mxu0 0
    %473 = vmatpush1.bf16.msra.mxu0 0
    %474 = vmatprep.subr.bf16.mxu0 0
    %475 = vmatpush1.bf16.msra.mxu0 0
    %476 = vmatprep.subr.bf16.mxu0 0
    %477 = vmatpush1.bf16.msra.mxu0 0
    %478 = vmatprep.subr.bf16.mxu0 0
    %479 = vmatpush1.bf16.msra.mxu0 0
    %480 = vmatprep.subr.bf16.mxu0 0
    %481 = vmatpush1.bf16.msra.mxu0 0
    %482 = vmatprep.subr.bf16.mxu0 0
    %483 = vmatpush1.bf16.msra.mxu0 0
    %484 = vmatprep.subr.bf16.mxu0 0
    %485 = vmatpush1.bf16.msra.mxu0 0
    %486 = vmatprep.subr.bf16.mxu0 0
    %487 = vmatpush1.bf16.msra.mxu0 0
    %488 = vmatprep.mubr.bf16.mxu0 0
    %489 = vmatmul.mubr.bf16.gmra.mrb[0].mxu0 %v451
    %v490 = vpop.f32.mrb[0].mxu0
    %v491 = vadd.f32 %v423, %v490
    %v492 = vpop.f32.mrb[0].mxu0
    %v493 = vadd.f32 %v423, %v492
    %v494 = vpop.f32.mrb[0].mxu0
    %v495 = vadd.f32 %v428, %v494
    %v496 = vpop.f32.mrb[0].mxu0
    %v497 = vadd.f32 %v428, %v496
    %498 = vmatprep.mubr.bf16.mxu0 0
    %499 = vmatmul.mubr.bf16.gmra.mrb[0].mxu0 %v454
    %v500 = vpop.f32.mrb[0].mxu0
    %v501 = vadd.f32 %v433, %v500
    %v502 = vpop.f32.mrb[0].mxu0
    %v503 = vadd.f32 %v433, %v502
    %v504 = vpop.f32.mrb[0].mxu0
    %v505 = vadd.f32 %v438, %v504
    %v506 = vpop.f32.mrb[0].mxu0
    %v507 = vadd.f32 %v438, %v506
    %508 = vdwg.mxu0
    %509 = vmatprep.subr.bf16.mxu0 %v405
    %510 = vmatpush1.bf16.msra.mxu0 %v404
    %511 = vmatprep.subr.bf16.mxu0 %v409
    %512 = vmatpush1.bf16.msra.mxu0 %v408
    %513 = vmatprep.subr.bf16.mxu0 0
    %514 = vmatpush1.bf16.msra.mxu0 0
    %515 = vmatprep.subr.bf16.mxu0 0
    %516 = vmatpush1.bf16.msra.mxu0 0
    %517 = vmatprep.subr.bf16.mxu0 0
    %518 = vmatpush1.bf16.msra.mxu0 0
    %519 = vmatprep.subr.bf16.mxu0 0
    %520 = vmatpush1.bf16.msra.mxu0 0
    %521 = vmatprep.subr.bf16.mxu0 0
    %522 = vmatpush1.bf16.msra.mxu0 0
    %523 = vmatprep.subr.bf16.mxu0 0
    %524 = vmatpush1.bf16.msra.mxu0 0
    %525 = vmatprep.subr.bf16.mxu0 0
    %526 = vmatpush1.bf16.msra.mxu0 0
    %527 = vmatprep.subr.bf16.mxu0 0
    %528 = vmatpush1.bf16.msra.mxu0 0
    %529 = vmatprep.subr.bf16.mxu0 0
    %530 = vmatpush1.bf16.msra.mxu0 0
    %531 = vmatprep.subr.bf16.mxu0 0
    %532 = vmatpush1.bf16.msra.mxu0 0
    %533 = vmatprep.subr.bf16.mxu0 0
    %534 = vmatpush1.bf16.msra.mxu0 0
    %535 = vmatprep.subr.bf16.mxu0 0
    %536 = vmatpush1.bf16.msra.mxu0 0
    %537 = vmatprep.subr.bf16.mxu0 0
    %538 = vmatpush1.bf16.msra.mxu0 0
    %539 = vmatprep.subr.bf16.mxu0 0
    %540 = vmatpush1.bf16.msra.mxu0 0
    %541 = vmatprep.mubr.bf16.mxu0 0
    %542 = vmatmul.mubr.bf16.gmra.mrb[0].mxu0 %v451
    %v543 = vpop.f32.mrb[0].mxu0
    %v544 = vadd.f32 %v423, %v543
    %v545 = vpop.f32.mrb[0].mxu0
    %v546 = vadd.f32 %v423, %v545
    %v547 = vpop.f32.mrb[0].mxu0
    %v548 = vadd.f32 %v428, %v547
    %v549 = vpop.f32.mrb[0].mxu0
    %v550 = vadd.f32 %v428, %v549
    %551 = vmatprep.mubr.bf16.mxu0 0
    %552 = vmatmul.mubr.bf16.gmra.mrb[0].mxu0 %v454
    %v553 = vpop.f32.mrb[0].mxu0
    %v554 = vadd.f32 %v433, %v553
    %v555 = vpop.f32.mrb[0].mxu0
    %v556 = vadd.f32 %v433, %v555
    %v557 = vpop.f32.mrb[0].mxu0
    %v558 = vadd.f32 %v438, %v557
    %v559 = vpop.f32.mrb[0].mxu0
    %v560 = vadd.f32 %v438, %v559
    %561 = vdwg.mxu0
    %v562 = vtanh.pop %v491
    %v563 = vtanh.pop %v493
    %v564 = vtanh.pop %v544
    %v565 = vtanh.pop %v546
    %v566 = vtanh.pop %v495
    %v567 = vtanh.pop %v497
    %v568 = vtanh.pop %v548
    %v569 = vtanh.pop %v550
    %v570 = vtanh.pop %v501
    %v571 = vtanh.pop %v503
    %v572 = vtanh.pop %v554
    %v573 = vtanh.pop %v556
    %v574 = vtanh.pop %v505
    %v575 = vtanh.pop %v507
    %v576 = vtanh.pop %v558
    %v577 = vtanh.pop %v560
    %v578 = vpack.c.bf16 %v566, %v562
    %v579 = vpack.c.bf16 %v567, %v563
    %v580 = vpack.c.bf16 %v568, %v564
    %v581 = vpack.c.bf16 %v569, %v565
    %v582 = vpack.c.bf16 %v574, %v570
    %v583 = vpack.c.bf16 %v575, %v571
    %v584 = vpack.c.bf16 %v576, %v572
    %v585 = vpack.c.bf16 %v577, %v573
    %v586 = vld [vmem:[%s5] sm:$0x1]
    %v587 = vld [vmem:[%s6] sm:$0x3]
    %589 = vset.pattern.permute.xlu0 0
    %590 = vperm.xlu0 %589, %v587
    %v591 = vpop.permute.xlu0 %590
    %v594 = vsel %vm273, %v586, 0
    %596 = vmatprep.subr.bf16.mxu0 %v579
    %597 = vmatpush1.bf16.msra.mxu0 %v578
    %598 = vmatprep.subr.bf16.mxu0 %v583
    %599 = vmatpush1.bf16.msra.mxu0 %v582
    %600 = vmatprep.subr.bf16.mxu0 0
    %601 = vmatpush1.bf16.msra.mxu0 0
    %602 = vmatprep.subr.bf16.mxu0 0
    %603 = vmatpush1.bf16.msra.mxu0 0
    %604 = vmatprep.subr.bf16.mxu0 0
    %605 = vmatpush1.bf16.msra.mxu0 0
    %606 = vmatprep.subr.bf16.mxu0 0
    %607 = vmatpush1.bf16.msra.mxu0 0
    %608 = vmatprep.subr.bf16.mxu0 0
    %609 = vmatpush1.bf16.msra.mxu0 0
    %610 = vmatprep.subr.bf16.mxu0 0
    %611 = vmatpush1.bf16.msra.mxu0 0
    %612 = vmatprep.subr.bf16.mxu0 0
    %613 = vmatpush1.bf16.msra.mxu0 0
    %614 = vmatprep.subr.bf16.mxu0 0
    %615 = vmatpush1.bf16.msra.mxu0 0
    %616 = vmatprep.subr.bf16.mxu0 0
    %617 = vmatpush1.bf16.msra.mxu0 0
    %618 = vmatprep.subr.bf16.mxu0 0
    %619 = vmatpush1.bf16.msra.mxu0 0
    %620 = vmatprep.subr.bf16.mxu0 0
    %621 = vmatpush1.bf16.msra.mxu0 0
    %622 = vmatprep.subr.bf16.mxu0 0
    %623 = vmatpush1.bf16.msra.mxu0 0
    %624 = vmatprep.subr.bf16.mxu0 0
    %625 = vmatpush1.bf16.msra.mxu0 0
    %626 = vmatprep.subr.bf16.mxu0 0
    %627 = vmatpush1.bf16.msra.mxu0 0
    %628 = vmatprep.mubr.bf16.mxu0 0
    %629 = vmatmul.mubr.bf16.gmra.mrb[0].mxu0 %v594
    %v630 = vpop.f32.mrb[0].mxu0
    %v631 = vadd.f32 %v591, %v630
    %v632 = vpop.f32.mrb[0].mxu0
    %v633 = vadd.f32 %v591, %v632
    %v634 = vpop.f32.mrb[0].mxu0
    %v635 = vpop.f32.mrb[0].mxu0
    %636 = vdwg.mxu0
    %637 = vmatprep.subr.bf16.mxu0 %v581
    %638 = vmatpush1.bf16.msra.mxu0 %v580
    %639 = vmatprep.subr.bf16.mxu0 %v585
    %640 = vmatpush1.bf16.msra.mxu0 %v584
    %641 = vmatprep.subr.bf16.mxu0 0
    %642 = vmatpush1.bf16.msra.mxu0 0
    %643 = vmatprep.subr.bf16.mxu0 0
    %644 = vmatpush1.bf16.msra.mxu0 0
    %645 = vmatprep.subr.bf16.mxu0 0
    %646 = vmatpush1.bf16.msra.mxu0 0
    %647 = vmatprep.subr.bf16.mxu0 0
    %648 = vmatpush1.bf16.msra.mxu0 0
    %649 = vmatprep.subr.bf16.mxu0 0
    %650 = vmatpush1.bf16.msra.mxu0 0
    %651 = vmatprep.subr.bf16.mxu0 0
    %652 = vmatpush1.bf16.msra.mxu0 0
    %653 = vmatprep.subr.bf16.mxu0 0
    %654 = vmatpush1.bf16.msra.mxu0 0
    %655 = vmatprep.subr.bf16.mxu0 0
    %656 = vmatpush1.bf16.msra.mxu0 0
    %657 = vmatprep.subr.bf16.mxu0 0
    %658 = vmatpush1.bf16.msra.mxu0 0
    %659 = vmatprep.subr.bf16.mxu0 0
    %660 = vmatpush1.bf16.msra.mxu0 0
    %661 = vmatprep.subr.bf16.mxu0 0
    %662 = vmatpush1.bf16.msra.mxu0 0
    %663 = vmatprep.subr.bf16.mxu0 0
    %664 = vmatpush1.bf16.msra.mxu0 0
    %665 = vmatprep.subr.bf16.mxu0 0
    %666 = vmatpush1.bf16.msra.mxu0 0
    %667 = vmatprep.subr.bf16.mxu0 0
    %668 = vmatpush1.bf16.msra.mxu0 0
    %669 = vmatprep.mubr.bf16.mxu0 0
    %670 = vmatmul.mubr.bf16.gmra.mrb[0].mxu0 %v594
    %v671 = vpop.f32.mrb[0].mxu0
    %v672 = vadd.f32 %v591, %v671
    %v673 = vpop.f32.mrb[0].mxu0
    %v674 = vadd.f32 %v591, %v673
    %v675 = vpop.f32.mrb[0].mxu0
    %v676 = vpop.f32.mrb[0].mxu0
    %677 = vdwg.mxu0
    %v682 = vcombine.low %v631, %v633
    %v683 = vcombine.low %v672, %v674
    %v685 = vunpack.c.l.s4 1983009808
    %v686 = vunpack.c.0.s8 %v685
    %v687 = vlaneseq
    %v688 = vshrl.u32 %v687, 7
    %v689 = vsub.s32 %v686, %v688
    %v690 = vrot.slane %v682, %v689
    %v692 = vunpack.c.l.s4 1983009808
    %v693 = vunpack.c.0.s8 %v692
    %v694 = vlaneseq
    %v695 = vshrl.u32 %v694, 7
    %v696 = vsub.s32 %v693, %v695
    %v697 = vrot.slane %v683, %v696
    %v698 = vcombine.low %v690, %v697
    %700 = vst [vmem:[#allocation2] sm:$0xff] %v698
    // Predicated region
    $region30: #{fcn_forward.1} parent=1 // pred_check
      _
    $region31: #{fcn_forward.1} parent=1 // pred_check_branch
      %702 = sbr.rel (0) target = $region33
    $region32: #{fcn_forward.1} parent=1 // pred_region
      %s704 = ssub.s32 128, 128
      %705 = vsyncadd [#allocation3], %s704
      %s707 = sshll.u32 [#allocation2], 4
      %s708 = int_to_ptr.vmem [resolvable:$true] %s707
      %710 = dma.vmem_to_hbm [thread:$0]  %s708, 128, %s7, [#allocation3]
    $region33: #{fcn_forward.1} parent=1 // pred_fallthru
      _
    // Predicated region
    $region34: #{fcn_forward.1} parent=1 // pred_check
      _
    $region35: #{fcn_forward.1} parent=1 // pred_check_branch
      %712 = sbr.rel (0) target = $region37
    $region36: #{fcn_forward.1} parent=1 // pred_region
      %713 = dma.done [#allocation3], 128
    $region37: #{fcn_forward.1} parent=1 // pred_fallthru
      _
    %714 = vsyncpa [#allocation3], 1

</llo_original>
